<compile_context>
chip_gen: v7x
topology: tpu7x:2x2x1
jax: 0.10.0
libtpu: 0.0.40
codegen_flags: <defaults>
</compile_context>

<pallas_src>
import jax
import jax.numpy as jnp
from jax import lax
from jax.experimental import pallas as pl
from jax.experimental.pallas import tpu as pltpu


def _resblock_kernel(x_ref, w_ref, b_ref, o_ref, acc_ref, res_ref):
    """Produces one (tm, tn) output tile; grid = (i, j, k), k is the reduction axis."""
    j = pl.program_id(1)
    k = pl.program_id(2)

    @pl.when(k == 0)
    def _init():
        acc_ref[...] = jnp.zeros_like(acc_ref)

    # tk == tn, so at k == j the LHS x block (i, k) *is* the residual block (i, j).
    # Snapshot it so x is never re-read from HBM for the residual add.
    @pl.when(k == j)
    def _snapshot_residual():
        res_ref[...] = x_ref[...]

    # Canonical MXU contraction: (tm, tk) x (tk, tn), native-dtype operands
    # (bf16 stays bf16), f32 accumulation.  No transposed-RHS dimension_numbers.
    acc_ref[...] += jnp.dot(x_ref[...], w_ref[...],
                            preferred_element_type=jnp.float32)

    @pl.when(k == pl.num_programs(2) - 1)
    def _finalize():
        y = acc_ref[...] + b_ref[...].astype(jnp.float32)
        # SiLU: y * sigmoid(y); the divide runs on the EUP via approximate vrcp.
        silu = y * pl.reciprocal(1.0 + jnp.exp(-y), approx=True)
        o_ref[...] = (res_ref[...].astype(jnp.float32) + silu).astype(o_ref.dtype)


def _round_up(x, m):
    return (x + m - 1) // m * m


def _pick_divisor_tile(dim, max_tile, align):
    """Largest multiple-of-`align` divisor of `dim` that is <= max_tile (None if none)."""
    if dim <= max_tile:
        return dim
    t = (max_tile // align) * align
    while t >= align:
        if dim % t == 0:
            return t
        t -= align
    return None


def _default_config():
    """Per-generation (tm_max, tn_max(=tk_max), vmem_limit_bytes).

    v5e / v6e expose 128 MiB VMEM per TensorCore -> large tiles + 96 MiB scoped
    limit (v6e has the highest ridge, ~650 FLOP/B, and needs the fattest tiles).
    v7x has 64 MiB per TensorCore -> moderate tiles with headroom below 64 MiB for
    compiler internal scratch and double buffers; ridge is only ~310 FLOP/B.
    """
    try:
        vmem_phys = int(pltpu.get_tpu_info().vmem_capacity_bytes)
    except Exception:
        vmem_phys = 64 * 1024 * 1024           # conservative (v7x-sized) fallback
    if vmem_phys >= 100 * 1024 * 1024:         # v5e / v6e class (128 MiB)
        return 2048, 1024, 96 * 1024 * 1024
    return 512, 1024, 48 * 1024 * 1024         # v7x class (64 MiB / TC)


def prepare_resblock_weight(weight):
    """One-time layout change: PyTorch nn.Linear (out, in) -> (in, out).

    Do this once when loading parameters so the kernel RHS is already canonical
    and no per-tile transpose is ever emitted (transpose once at init, not per call).
    """
    return jnp.asarray(weight).T


def resblock(x, weight_t, bias, *, tm_max=None, tn_max=None,
             vmem_limit_bytes=None, cast_to_bf16=False):
    """out = x + SiLU(x @ W.T + b).

    Args:
      x:        (M, H) activations.
      weight_t: (H, H) weight in (in, out) layout (see prepare_resblock_weight).
      bias:     (H,) bias.
    """
    M, H = x.shape
    assert weight_t.shape == (H, H), "ResBlock linear must be square (H, H)"
    assert bias.shape == (H,)

    d_tm, d_tn, d_vmem = _default_config()
    tm_max = d_tm if tm_max is None else tm_max
    tn_max = d_tn if tn_max is None else tn_max
    vmem_limit_bytes = d_vmem if vmem_limit_bytes is None else vmem_limit_bytes

    # Output / reduction tiles are tied (tk == tn) so the residual tile coincides
    # with the matmul-LHS x tile at k == j (see kernel snapshot).
    # TODO(synk): for an H with no 128-aligned divisor <= tn_max this falls back to
    # a single full-H block (legal; may need a larger VMEM limit for very large H).
    tn = _pick_divisor_tile(H, tn_max, 128) or H
    tk = tn

    # Token tile: prefer an exact multiple-of-8 divisor of M; otherwise pad M.
    tm = _pick_divisor_tile(M, tm_max, 8)
    if tm is None:
        tm = max(8, (tm_max // 8) * 8)
    m_pad = _round_up(M, tm)

    x_in = x
    if m_pad != M:
        x_in = jnp.pad(x_in, ((0, m_pad - M), (0, 0)))

    if cast_to_bf16:
        # Optional: halves HBM bytes of the two dominant streams and uses the fast
        # bf16 MXU path.  Accumulation stays f32; output keeps x's original dtype.
        if x_in.dtype == jnp.float32:
            x_in = x_in.astype(jnp.bfloat16)
        if weight_t.dtype == jnp.float32:
            weight_t = weight_t.astype(jnp.bfloat16)

    b2 = bias.reshape(1, H)
    grid = (m_pad // tm, H // tn, H // tk)

    out = pl.pallas_call(
        _resblock_kernel,
        out_shape=jax.ShapeDtypeStruct((m_pad, H), x.dtype),
        grid=grid,
        in_specs=[
            pl.BlockSpec((tm, tk), lambda i, j, k: (i, k)),   # x  (matmul LHS)
            pl.BlockSpec((tk, tn), lambda i, j, k: (k, j)),   # W in (in, out) layout
            pl.BlockSpec((1, tn), lambda i, j, k: (0, j)),    # bias slice
        ],
        out_specs=pl.BlockSpec((tm, tn), lambda i, j, k: (i, j)),
        scratch_shapes=[
            pltpu.VMEM((tm, tn), jnp.float32),   # f32 accumulator
            pltpu.VMEM((tm, tn), x_in.dtype),    # residual x tile snapshot
        ],
        compiler_params=pltpu.CompilerParams(
            dimension_semantics=("parallel", "parallel", "arbitrary"),
            vmem_limit_bytes=vmem_limit_bytes,
        ),
    )(x_in, weight_t, b2)

    return out[:M] if m_pad != M else out


if __name__ == "__main__":
    key = jax.random.PRNGKey(0)
    k_x0, k_b0, k_x, k_w, k_b, k_x2 = jax.random.split(key, 6)

    # ---- Test 1: module-spec init (zero weight), small shapes, f32. ------------
    M0, H0 = 8, 32
    x0 = jax.random.normal(k_x0, (M0, H0), dtype=jnp.float32)
    w0 = jnp.zeros((H0, H0), dtype=jnp.float32)            # nn.init.zeros_
    bound0 = 1.0 / (H0 ** 0.5)                             # default Linear bias init
    b0 = jax.random.uniform(k_b0, (H0,), minval=-bound0, maxval=bound0,
                            dtype=jnp.float32)
    out0 = jax.block_until_ready(resblock(x0, prepare_resblock_weight(w0), b0))
    y0 = x0 @ w0.T + b0
    ref0 = x0 + y0 * jax.nn.sigmoid(y0)
    assert jnp.allclose(out0, ref0, atol=2e-3, rtol=2e-3), "test1 mismatch"

    # ---- Test 2: nonzero W, bf16, (2, 2, 2) grid: exercises the K reduction, ---
    # the k == j residual snapshot, and both parallel axes.
    M, H = 64, 256
    x = jax.random.normal(k_x, (M, H), dtype=jnp.float32).astype(jnp.bfloat16)
    w = (0.02 * jax.random.normal(k_w, (H, H), dtype=jnp.float32)).astype(jnp.bfloat16)
    bound = 1.0 / (H ** 0.5)
    b = jax.random.uniform(k_b, (H,), minval=-bound, maxval=bound,
                           dtype=jnp.float32).astype(jnp.bfloat16)
    wt = prepare_resblock_weight(w)
    out = jax.block_until_ready(resblock(x, wt, b, tm_max=32, tn_max=128))

    x32, w32, b32 = x.astype(jnp.float32), w.astype(jnp.float32), b.astype(jnp.float32)
    y_ref = jnp.dot(x32, w32.T, precision=lax.Precision.HIGHEST) + b32
    ref = x32 + y_ref * jax.nn.sigmoid(y_ref)
    assert jnp.allclose(out.astype(jnp.float32), ref, atol=3e-2, rtol=3e-2), \
        "test2 mismatch"

    # ---- Test 3: M with no aligned divisor -> wrapper padding path. ------------
    M2 = 20
    x2 = jax.random.normal(k_x2, (M2, H), dtype=jnp.float32).astype(jnp.bfloat16)
    out2 = jax.block_until_ready(resblock(x2, wt, b, tm_max=16, tn_max=128))
    assert out2.shape == (M2, H)
    x2_32 = x2.astype(jnp.float32)
    y2 = jnp.dot(x2_32, w32.T, precision=lax.Precision.HIGHEST) + b32
    ref2 = x2_32 + y2 * jax.nn.sigmoid(y2)
    assert jnp.allclose(out2.astype(jnp.float32), ref2, atol=3e-2, rtol=3e-2), \
        "test3 mismatch"

    print("KERNEL_OK")
</pallas_src>

<mosaic_0001>
module attributes {stable_mosaic.version = 11 : i64} {
  func.func @_resblock_kernel(%arg0: i32, %arg1: i32, %arg2: i32, %arg3: memref<8x32xf32, #tpu.memory_space<vmem>>, %arg4: memref<32x32xf32, #tpu.memory_space<vmem>>, %arg5: memref<1x32xf32, #tpu.memory_space<vmem>>, %arg6: memref<8x32xf32, #tpu.memory_space<vmem>>, %arg7: memref<8x32xf32, #tpu.memory_space<vmem>>, %arg8: memref<8x32xf32, #tpu.memory_space<vmem>>) attributes {dimension_semantics = [#tpu.dimension_semantics<parallel>, #tpu.dimension_semantics<parallel>, #tpu.dimension_semantics<arbitrary>], iteration_bounds = array<i64: 1, 1, 1>, scalar_prefetch = 0 : i64, scratch_operands = 2 : i64, tpu.core_type = #tpu.core_type<tc>, window_params = [{transform_indices = @transform_0, window_bounds = array<i64: 8, 32>}, {transform_indices = @transform_1, window_bounds = array<i64: 32, 32>}, {transform_indices = @transform_2, window_bounds = array<i64: 1, 32>}, {transform_indices = @transform_3, window_bounds = array<i64: 8, 32>}]} {
    %c0_i32 = arith.constant 0 : i32
    %0 = arith.cmpi eq, %arg2, %c0_i32 : i32
    %1 = arith.extui %0 : i1 to i32
    %c0_i32_0 = arith.constant 0 : i32
    %2 = arith.cmpi ne, %1, %c0_i32_0 : i32
    scf.if %2 {
      %cst_11 = arith.constant 0.000000e+00 : f32
      %15 = vector.broadcast %cst_11 : f32 to vector<8x32xf32>
      %c0_12 = arith.constant 0 : index
      %c0_13 = arith.constant 0 : index
      %16 = vector.load %arg7[%c0_12, %c0_13] : memref<8x32xf32, #tpu.memory_space<vmem>>, vector<8x32xf32>
      tpu.vector_store %arg7[%c0_12, %c0_13], %15 {strides = array<i32>} : memref<8x32xf32, #tpu.memory_space<vmem>>, vector<8x32xf32>,
    } else {
    }
    %3 = arith.cmpi eq, %arg2, %arg1 : i32
    %4 = arith.extui %3 : i1 to i32
    %c0_i32_1 = arith.constant 0 : i32
    %5 = arith.cmpi ne, %4, %c0_i32_1 : i32
    scf.if %5 {
      %c0_11 = arith.constant 0 : index
      %c0_12 = arith.constant 0 : index
      %15 = vector.load %arg3[%c0_11, %c0_12] : memref<8x32xf32, #tpu.memory_space<vmem>>, vector<8x32xf32>
      %c0_13 = arith.constant 0 : index
      %c0_14 = arith.constant 0 : index
      %16 = vector.load %arg8[%c0_13, %c0_14] : memref<8x32xf32, #tpu.memory_space<vmem>>, vector<8x32xf32>
      tpu.vector_store %arg8[%c0_13, %c0_14], %15 {strides = array<i32>} : memref<8x32xf32, #tpu.memory_space<vmem>>, vector<8x32xf32>,
    } else {
    }
    %c0 = arith.constant 0 : index
    %c0_2 = arith.constant 0 : index
    %6 = vector.load %arg7[%c0, %c0_2] : memref<8x32xf32, #tpu.memory_space<vmem>>, vector<8x32xf32>
    %c0_3 = arith.constant 0 : index
    %c0_4 = arith.constant 0 : index
    %7 = vector.load %arg3[%c0_3, %c0_4] : memref<8x32xf32, #tpu.memory_space<vmem>>, vector<8x32xf32>
    %c0_5 = arith.constant 0 : index
    %c0_6 = arith.constant 0 : index
    %8 = vector.load %arg4[%c0_5, %c0_6] : memref<32x32xf32, #tpu.memory_space<vmem>>, vector<32x32xf32>
    %cst = arith.constant dense<0.000000e+00> : vector<8x32xf32>
    %9 = tpu.matmul %7, %8, %cst {dimension_numbers = #tpu.dot_dimension_numbers<[1], [0], [0], [1], [0, 0, 1, 1], [], []>} : vector<8x32xf32>, vector<32x32xf32>, vector<8x32xf32> -> vector<8x32xf32>
    %10 = arith.addf %6, %9 : vector<8x32xf32>
    %c0_7 = arith.constant 0 : index
    %c0_8 = arith.constant 0 : index
    %11 = vector.load %arg7[%c0_7, %c0_8] : memref<8x32xf32, #tpu.memory_space<vmem>>, vector<8x32xf32>
    tpu.vector_store %arg7[%c0_7, %c0_8], %10 {strides = array<i32>} : memref<8x32xf32, #tpu.memory_space<vmem>>, vector<8x32xf32>,
    %c0_i32_9 = arith.constant 0 : i32
    %12 = arith.cmpi eq, %arg2, %c0_i32_9 : i32
    %13 = arith.extui %12 : i1 to i32
    %c0_i32_10 = arith.constant 0 : i32
    %14 = arith.cmpi ne, %13, %c0_i32_10 : i32
    scf.if %14 {
      %c0_11 = arith.constant 0 : index
      %c0_12 = arith.constant 0 : index
      %15 = vector.load %arg7[%c0_11, %c0_12] : memref<8x32xf32, #tpu.memory_space<vmem>>, vector<8x32xf32>
      %c0_13 = arith.constant 0 : index
      %c0_14 = arith.constant 0 : index
      %16 = vector.load %arg5[%c0_13, %c0_14] : memref<1x32xf32, #tpu.memory_space<vmem>>, vector<1x32xf32>
      %17 = vector.broadcast %16 : vector<1x32xf32> to vector<8x32xf32>
      %18 = arith.addf %15, %17 : vector<8x32xf32>
      %cst_15 = arith.constant 0.000000e+00 : f32
      %19 = vector.broadcast %cst_15 : f32 to vector<8x32xf32>
      %20 = arith.subf %19, %18 : vector<8x32xf32>
      %21 = math.exp %20 : vector<8x32xf32>
      %cst_16 = arith.constant 1.000000e+00 : f32
      %22 = vector.broadcast %cst_16 : f32 to vector<8x32xf32>
      %23 = arith.addf %22, %21 : vector<8x32xf32>
      %24 = tpu.reciprocal %23 {approx = true} : vector<8x32xf32> -> vector<8x32xf32>
      %25 = arith.mulf %18, %24 : vector<8x32xf32>
      %c0_17 = arith.constant 0 : index
      %c0_18 = arith.constant 0 : index
      %26 = vector.load %arg8[%c0_17, %c0_18] : memref<8x32xf32, #tpu.memory_space<vmem>>, vector<8x32xf32>
      %27 = arith.addf %26, %25 : vector<8x32xf32>
      %c0_19 = arith.constant 0 : index
      %c0_20 = arith.constant 0 : index
      %28 = vector.load %arg6[%c0_19, %c0_20] : memref<8x32xf32, #tpu.memory_space<vmem>>, vector<8x32xf32>
      tpu.vector_store %arg6[%c0_19, %c0_20], %27 {strides = array<i32>} : memref<8x32xf32, #tpu.memory_space<vmem>>, vector<8x32xf32>,
    } else {
    }
    return
  }
  func.func @transform_0(%arg0: i32, %arg1: i32, %arg2: i32) -> (i32, i32) {
    %c0_i32 = arith.constant 0 : i32
    return %arg0, %arg2 : i32, i32
  }
  func.func @transform_1(%arg0: i32, %arg1: i32, %arg2: i32) -> (i32, i32) {
    %c0_i32 = arith.constant 0 : i32
    return %arg2, %arg1 : i32, i32
  }
  func.func @transform_2(%arg0: i32, %arg1: i32, %arg2: i32) -> (i32, i32) {
    %c0_i32 = arith.constant 0 : i32
    %c0_i32_0 = arith.constant 0 : i32
    return %c0_i32, %arg1 : i32, i32
  }
  func.func @transform_3(%arg0: i32, %arg1: i32, %arg2: i32) -> (i32, i32) {
    %c0_i32 = arith.constant 0 : i32
    return %arg0, %arg1 : i32, i32
  }
}

</mosaic_0001>

<llo_original>
// kernel: tpu_custom_call.1
$region0: #{tpu_custom_call.1}
  #allocation0 [shape = 'u32[]', space=smem, size = 0x4, offset = 0x4, fixed_abs, tag = 'smem constant byte address 0x4 - core index']
  #allocation1 [shape = 'u32[144,128]{1,0:T(1,128)}', space=vmem, size = 0x12000, scoped, tag = 'internal scratch']
  #allocation2 [shape = 'f32[8,32]{1,0:T(8,128)}', space=vmem, size = 0x1000, scoped, tag = 'scratch operand']
  #allocation3 [shape = 'f32[8,32]{1,0:T(8,128)}', space=vmem, size = 0x1000, scoped, tag = 'scratch operand']
  %s0 = inlined_call_operand.hbm [shape: f32[8,32], index: 0, kind: input, shape index: {}]
  %s1 = inlined_call_operand.hbm [shape: f32[32,32], index: 1, kind: input, shape index: {}]
  %s2 = inlined_call_operand.vmem [shape: f32[1,32], index: 2, kind: input, shape index: {}]
  %s3 = inlined_call_operand.hbm [shape: f32[8,32], index: 3, kind: output, shape index: {}]
  %s4 = sld [smem:[#allocation0]]
  $region42: #{tpu_custom_call.1} parent=0
    _
  %s6 = ssub.s32 1, %s4
  %s7 = scalar_select 0, %s6, %s4
  $region1: #{tpu_custom_call.1} parent=0
    #allocation4 [shape = 'u8[4096]{0}', space=vmem, size = 0x1000, scoped, tag = 'input window, operand 0, single buffered']
    #allocation5 [shape = 's32[1]{0}', space=sflag, size = 0x4, scoped, tag = 'scoped memory for tpu_custom_call.1']
    #allocation6 [shape = 's32[1]{0}', space=sflag, size = 0x4, scoped, tag = 'scoped memory for tpu_custom_call.1']
    #allocation7 [shape = 'u8[16384]{0}', space=vmem, size = 0x4000, scoped, tag = 'input window, operand 1, single buffered']
    #allocation8 [shape = 's32[1]{0}', space=sflag, size = 0x4, scoped, tag = 'scoped memory for tpu_custom_call.1']
    #allocation9 [shape = 'u8[4096]{0}', space=vmem, size = 0x1000, scoped, tag = 'output window, operand 0, single buffered']
    %8 = vsyncpa [#allocation5], 0
    %9 = vsyncpa [#allocation8], 0
    %10 = vsyncpa [#allocation6], 0
    // Predicated region
    $region2: #{tpu_custom_call.1} parent=1 // pred_check
      _
    $region3: #{tpu_custom_call.1} parent=1 // pred_check_branch
      %12 = sbr.rel (0) target = $region5
    $region4: #{tpu_custom_call.1} parent=1 // pred_region
      %s14 = ssub.s32 128, 128
      %15 = vsyncadd [#allocation5], %s14
      %s17 = sshll.u32 [#allocation4], 4
      %s18 = int_to_ptr.vmem [resolvable:$true] %s17
      %20 = dma.hbm_to_vmem [thread:$0]  %s0, 128, %s18, [#allocation5]
    $region5: #{tpu_custom_call.1} parent=1 // pred_fallthru
      _
    // Predicated region
    $region6: #{tpu_custom_call.1} parent=1 // pred_check
      _
    $region7: #{tpu_custom_call.1} parent=1 // pred_check_branch
      %22 = sbr.rel (0) target = $region9
    $region8: #{tpu_custom_call.1} parent=1 // pred_region
      %s24 = ssub.s32 512, 512
      %25 = vsyncadd [#allocation8], %s24
      %s26 = sshll.u32 [#allocation7], 4
      %s27 = int_to_ptr.vmem [resolvable:$true] %s26
      %32 = dma.hbm_to_vmem [thread:$0]  %s1, 512, %s27, [#allocation8], 128, 128, 8
    $region9: #{tpu_custom_call.1} parent=1 // pred_fallthru
      _
    // Predicated region
    $region10: #{tpu_custom_call.1} parent=1 // pred_check
      _
    $region11: #{tpu_custom_call.1} parent=1 // pred_check_branch
      %34 = sbr.rel (0) target = $region13
    $region12: #{tpu_custom_call.1} parent=1 // pred_region
      _
    $region13: #{tpu_custom_call.1} parent=1 // pred_fallthru
      _
    // Predicated region
    $region14: #{tpu_custom_call.1} parent=1 // pred_check
      _
    $region15: #{tpu_custom_call.1} parent=1 // pred_check_branch
      %36 = sbr.rel (0) target = $region17
    $region16: #{tpu_custom_call.1} parent=1 // pred_region
      %37 = dma.done [#allocation5], 128
    $region17: #{tpu_custom_call.1} parent=1 // pred_fallthru
      _
    // Predicated region
    $region18: #{tpu_custom_call.1} parent=1 // pred_check
      _
    $region19: #{tpu_custom_call.1} parent=1 // pred_check_branch
      %39 = sbr.rel (0) target = $region21
    $region20: #{tpu_custom_call.1} parent=1 // pred_region
      %40 = dma.done [#allocation8], 512
    $region21: #{tpu_custom_call.1} parent=1 // pred_fallthru
      _
    %p41 = scmp.eq.s32.totalorder 0, 0
    // Predicated region
    $region22: #{tpu_custom_call.1} parent=1 // pred_check
      %p42 = pneg %p41
    $region23: #{tpu_custom_call.1} parent=1 // pred_check_branch
      %44 = sbr.rel (%p42) target = $region25
    $region24: #{tpu_custom_call.1} parent=1 // pred_region
      %vm45 = vcmask 261120
      %46 = vst.msk [vmem:[#allocation2] sm:$0xff] %vm45, 0.0
    $region25: #{tpu_custom_call.1} parent=1 // pred_fallthru
      _
    %p47 = scmp.eq.s32.totalorder 0, 0
    // Predicated region
    $region26: #{tpu_custom_call.1} parent=1 // pred_check
      %p48 = pneg %p47
    $region27: #{tpu_custom_call.1} parent=1 // pred_check_branch
      %50 = sbr.rel (%p48) target = $region29
    $region28: #{tpu_custom_call.1} parent=1 // pred_region
      %v51 = vld [vmem:[#allocation4] sm:$0xff]
      %vm52 = vcmask 261120
      %53 = vst.msk [vmem:[#allocation3] sm:$0xff] %vm52, %v51
    $region29: #{tpu_custom_call.1} parent=1 // pred_fallthru
      _
    %v54 = vld [vmem:[#allocation2] sm:$0xff]
    %v55 = vld [vmem:[#allocation4] sm:$0xff]
    %v56 = vld [vmem:[#allocation7] sm:$0xff]
    %v57 = vld [vmem:[#allocation7 + $0x8] sm:$0xff]
    %v58 = vld [vmem:[#allocation7 + $0x10] sm:$0xff]
    %v59 = vld [vmem:[#allocation7 + $0x18] sm:$0xff]
    %vm60 = vcmask 261120
    %v62 = vsel %vm60, %v55, 0
    %64 = vmatprep.subr.mxu0 0.0
    %65 = vmatpush1.msra.mxu0 %v56
    %66 = vmatprep.subr.mxu0 0.0
    %67 = vmatpush1.msra.mxu0 %v57
    %68 = vmatprep.subr.mxu0 0.0
    %69 = vmatpush1.msra.mxu0 %v58
    %70 = vmatprep.subr.mxu0 0.0
    %71 = vmatpush1.msra.mxu0 %v59
    %72 = vmatprep.subr.mxu0 0.0
    %73 = vmatpush1.msra.mxu0 0.0
    %74 = vmatprep.subr.mxu0 0.0
    %75 = vmatpush1.msra.mxu0 0.0
    %76 = vmatprep.subr.mxu0 0.0
    %77 = vmatpush1.msra.mxu0 0.0
    %78 = vmatprep.subr.mxu0 0.0
    %79 = vmatpush1.msra.mxu0 0.0
    %80 = vmatprep.subr.mxu0 0.0
    %81 = vmatpush1.msra.mxu0 0.0
    %82 = vmatprep.subr.mxu0 0.0
    %83 = vmatpush1.msra.mxu0 0.0
    %84 = vmatprep.subr.mxu0 0.0
    %85 = vmatpush1.msra.mxu0 0.0
    %86 = vmatprep.subr.mxu0 0.0
    %87 = vmatpush1.msra.mxu0 0.0
    %88 = vmatprep.subr.mxu0 0.0
    %89 = vmatpush1.msra.mxu0 0.0
    %90 = vmatprep.subr.mxu0 0.0
    %91 = vmatpush1.msra.mxu0 0.0
    %92 = vmatprep.subr.mxu0 0.0
    %93 = vmatpush1.msra.mxu0 0.0
    %94 = vmatprep.subr.mxu0 0.0
    %95 = vmatpush1.msra.mxu0 0.0
    %96 = vmatprep.subr.mxu0 0.0
    %97 = vmatpush1.msra.mxu0 0.0
    %98 = vmatprep.subr.mxu0 0.0
    %99 = vmatpush1.msra.mxu0 0.0
    %100 = vmatprep.subr.mxu0 0.0
    %101 = vmatpush1.msra.mxu0 0.0
    %102 = vmatprep.subr.mxu0 0.0
    %103 = vmatpush1.msra.mxu0 0.0
    %104 = vmatprep.subr.mxu0 0.0
    %105 = vmatpush1.msra.mxu0 0.0
    %106 = vmatprep.subr.mxu0 0.0
    %107 = vmatpush1.msra.mxu0 0.0
    %108 = vmatprep.subr.mxu0 0.0
    %109 = vmatpush1.msra.mxu0 0.0
    %110 = vmatprep.subr.mxu0 0.0
    %111 = vmatpush1.msra.mxu0 0.0
    %112 = vmatprep.subr.mxu0 0.0
    %113 = vmatpush1.msra.mxu0 0.0
    %114 = vmatprep.subr.mxu0 0.0
    %115 = vmatpush1.msra.mxu0 0.0
    %116 = vmatprep.subr.mxu0 0.0
    %117 = vmatpush1.msra.mxu0 0.0
    %118 = vmatprep.subr.mxu0 0.0
    %119 = vmatpush1.msra.mxu0 0.0
    %120 = vmatprep.subr.mxu0 0.0
    %121 = vmatpush1.msra.mxu0 0.0
    %122 = vmatprep.subr.mxu0 0.0
    %123 = vmatpush1.msra.mxu0 0.0
    %124 = vmatprep.subr.mxu0 0.0
    %125 = vmatpush1.msra.mxu0 0.0
    %126 = vmatprep.subr.mxu0 0.0
    %127 = vmatpush1.msra.mxu0 0.0
    %128 = vmatprep.mubr.f32.mxu0 0.0
    %129 = vmatmul.mubr.f32.gmra.mrb[0].mxu0 %v62
    %v130 = vpop.f32.mrb[0].mxu0
    %v131 = vadd.f32 0.0, %v130
    %v132 = vpop.f32.mrb[0].mxu0
    %133 = vdwg.mxu0
    %v134 = vadd.f32 %v54, %v131
    %135 = vst.msk [vmem:[#allocation2] sm:$0xff] %vm60, %v134
    // Predicated region
    $region30: #{tpu_custom_call.1} parent=1 // pred_check
      %p136 = pneg %p41
    $region31: #{tpu_custom_call.1} parent=1 // pred_check_branch
      %138 = sbr.rel (%p136) target = $region33
    $region32: #{tpu_custom_call.1} parent=1 // pred_region
      %v139 = vld [vmem:[#allocation2] sm:$0xff]
      %v140 = vld [vmem:[%s2] sm:$0x1]
      %v142 = vlaneseq
      %v143 = vshrl.u32 %v142, 7
      %v144 = vsub.s32 0, %v143
      %v145 = vrot.slane %v140, %v144
      %v147 = vadd.f32 %v139, %v145
      %v148 = vsub.f32 0.0, %v147
      %v149 = vmul.f32 %v148, 1.442695
      %v150 = vpow.pop %v149
      %v151 = vadd.f32 %v150, 1.0
      %v152 = vrcp.pop %v151
      %v153 = vmul.f32 %v147, %v152
      %v154 = vld [vmem:[#allocation3] sm:$0xff]
      %v155 = vadd.f32 %v154, %v153
      %156 = vst.msk [vmem:[#allocation9] sm:$0xff] %vm60, %v155
    $region33: #{tpu_custom_call.1} parent=1 // pred_fallthru
      _
    // Predicated region
    $region34: #{tpu_custom_call.1} parent=1 // pred_check
      _
    $region35: #{tpu_custom_call.1} parent=1 // pred_check_branch
      %158 = sbr.rel (0) target = $region37
    $region36: #{tpu_custom_call.1} parent=1 // pred_region
      %s160 = ssub.s32 128, 128
      %161 = vsyncadd [#allocation6], %s160
      %s163 = sshll.u32 [#allocation9], 4
      %s164 = int_to_ptr.vmem [resolvable:$true] %s163
      %166 = dma.vmem_to_hbm [thread:$0]  %s164, 128, %s3, [#allocation6]
    $region37: #{tpu_custom_call.1} parent=1 // pred_fallthru
      _
    // Predicated region
    $region38: #{tpu_custom_call.1} parent=1 // pred_check
      _
    $region39: #{tpu_custom_call.1} parent=1 // pred_check_branch
      %168 = sbr.rel (0) target = $region41
    $region40: #{tpu_custom_call.1} parent=1 // pred_region
      %169 = dma.done [#allocation6], 128
    $region41: #{tpu_custom_call.1} parent=1 // pred_fallthru
      _
    %170 = vsyncpa [#allocation5], 1
    %171 = vsyncpa [#allocation8], 1
    %172 = vsyncpa [#allocation6], 1

</llo_original>
